<compile_context>
chip_gen: v5e
topology: v5e:2x2
jax: 0.10.0
libtpu: 0.0.40
codegen_flags: <defaults>
</compile_context>

<pallas_src>
import functools

import jax
import jax.numpy as jnp
from jax.experimental import pallas as pl
from jax.experimental.pallas import tpu as pltpu


# ---------------------------------------------------------------------------
# Kernel: stable softmax over the last axis of a (block_rows, N) tile.
# ---------------------------------------------------------------------------

def _softmax_last_kernel(x_ref, o_ref, *, scale):
    x = x_ref[...].astype(jnp.float32)
    if scale == 1.0:                      # Python-level branch: elided at trace
        m = jnp.max(x, axis=-1, keepdims=True)
        e = jnp.exp(x - m)
    elif scale > 0.0:
        # softmax(scale*x) == exp(scale*(x - max(x))) / sum(...)  (argmax is
        # scale-invariant for scale > 0) -> no scaled full-tile copy of x.
        m = jnp.max(x, axis=-1, keepdims=True)
        e = jnp.exp((x - m) * jnp.float32(scale))
    else:
        xs = x * jnp.float32(scale)
        m = jnp.max(xs, axis=-1, keepdims=True)
        e = jnp.exp(xs - m)
    s = jnp.sum(e, axis=-1, keepdims=True)
    # Accurate per-row reciprocal (EUP + refinement).  The refinement cost is
    # per row, i.e. negligible for a memory-bound kernel, and avoids the
    # approx-reciprocal parity issues flagged in review.
    o_ref[...] = (e * pl.reciprocal(s, approx=False)).astype(o_ref.dtype)


# ---------------------------------------------------------------------------
# Tiling helpers
# ---------------------------------------------------------------------------

def _round_up(a, m):
    return -(-a // m) * m


def _round_down(a, m):
    return (a // m) * m


def _sublane_multiple(dtype):
    # sub-32-bit dtypes pack along sublanes: 8 rows (f32), 16 (bf16), 32 (i8/fp8)
    return {4: 8, 2: 16, 1: 32}.get(jnp.dtype(dtype).itemsize, 8)


def _vmem_budget_bytes():
    """(tile budget, scoped vmem limit) derived from the chip's VMEM size."""
    try:
        cap = int(pltpu.get_tpu_info().vmem_capacity_bytes)
    except Exception:
        cap = 64 * 1024 * 1024  # conservative default (v7x per-TC VMEM)
    budget = min(cap // 2, 48 * 1024 * 1024)       # v7x: 32 MiB, v5e/v6e: 48 MiB
    limit = min((cap * 3) // 4, 64 * 1024 * 1024)  # v7x: 48 MiB, v5e/v6e: 64 MiB
    return budget, limit


_TARGET_BLOCK_IN_BYTES = 8 * 1024 * 1024   # ~8 MiB input/block: roofline plateau
_SMALL_INPUT_BYTES = 1 * 1024 * 1024       # below this, forcing a split is pure
                                           # per-step overhead (v5e/v6e: 1 TC)


def _pick_block_rows(R, N, itemsize, sub, budget):
    """Bytes-driven row-block size for the (R, N) row-softmax kernel."""
    in_row = N * itemsize                  # HBM bytes of input per row
    # VMEM cost per row: double-buffered input + output (4*itemsize/elem)
    # plus ~2 fp32 temporaries inside the body (8 bytes/elem).
    vmem_row = N * (4 * itemsize + 8)

    rows = min(max(1, _TARGET_BLOCK_IN_BYTES // in_row),
               max(1, budget // vmem_row))
    rows = max(sub, _round_down(rows, sub))

    if rows >= R:
        total_in = R * in_row
        if total_in >= _SMALL_INPUT_BYTES and R >= 4 * sub:
            # Keep >= 4 grid steps so v7x megacore gets >= 2 blocks per core
            # (restores DMA/compute overlap on each core).
            rows = max(sub, _round_up(-(-R // 4), sub))
        else:
            rows = R                       # full leading dim is always legal
    return rows


# ---------------------------------------------------------------------------
# Row-softmax driver over a 2-D (R, N) view
# ---------------------------------------------------------------------------

def _softmax_2d(x2, scale):
    R, N = x2.shape
    itemsize = jnp.dtype(x2.dtype).itemsize
    sub = _sublane_multiple(x2.dtype)
    budget, vmem_limit = _vmem_budget_bytes()

    block_rows = _pick_block_rows(R, N, itemsize, sub, budget)
    grid = (pl.cdiv(R, block_rows),)       # ragged last block OK: rows independent

    return pl.pallas_call(
        functools.partial(_softmax_last_kernel, scale=scale),
        out_shape=jax.ShapeDtypeStruct((R, N), x2.dtype),
        grid_spec=pltpu.PrefetchScalarGridSpec(
            num_scalar_prefetch=0,
            grid=grid,
            in_specs=[pl.BlockSpec((block_rows, N), lambda i: (i, 0))],
            out_specs=pl.BlockSpec((block_rows, N), lambda i: (i, 0)),
        ),
        compiler_params=pltpu.CompilerParams(
            dimension_semantics=("parallel",),
            vmem_limit_bytes=vmem_limit,
        ),
    )(x2)


# ---------------------------------------------------------------------------
# Public wrapper (matches Softmax.forward(x, dim, invAttnHead))
# ---------------------------------------------------------------------------

def pallas_softmax(x, dim=None, invAttnHead=None):
    """softmax(x * invAttnHead) along `dim` (default last axis)."""
    if dim is None:
        dim = -1
    dim = dim % x.ndim
    scale = 1.0 if invAttnHead is None else float(invAttnHead)

    if dim != x.ndim - 1:
        # TODO(synk): an in-kernel axis-1 reduce (no HBM transpose round-trip)
        # produced incorrect results; fall back to moveaxis + the proven
        # last-axis kernel.  dim != -1 is a cold path for this module.
        xt = jnp.moveaxis(x, dim, -1)
        N = xt.shape[-1]
        ot = _softmax_2d(xt.reshape(-1, N), scale).reshape(xt.shape)
        return jnp.moveaxis(ot, -1, dim)

    N = x.shape[-1]
    return _softmax_2d(x.reshape(-1, N), scale).reshape(x.shape)


if __name__ == "__main__":
    key = jax.random.PRNGKey(0)
    # attention-score-like input: [batch=2, heads=4, seq_q=16, seq_k=16]
    x = jax.random.normal(key, (2, 4, 16, 16), dtype=jnp.float32)
    inv_attn_head = 1.0 / (32.0 ** 0.5)  # e.g. 1/sqrt(head_dim)

    # main path: softmax over the last axis with scaling
    out = pallas_softmax(x, dim=-1, invAttnHead=inv_attn_head)
    out = jax.block_until_ready(out)
    ref = jax.nn.softmax(x * inv_attn_head, axis=-1)
    assert out.shape == x.shape and out.dtype == x.dtype
    assert float(jnp.max(jnp.abs(out - ref))) < 1e-3

    # dim != -1 path (moveaxis fallback onto the same row kernel)
    out2 = pallas_softmax(x, dim=1, invAttnHead=None)
    out2 = jax.block_until_ready(out2)
    ref2 = jax.nn.softmax(x, axis=1)
    assert out2.shape == x.shape and out2.dtype == x.dtype
    assert float(jnp.max(jnp.abs(out2 - ref2))) < 1e-3

    print("KERNEL_OK")
</pallas_src>

<mosaic_0001>
module attributes {stable_mosaic.version = 11 : i64} {
  func.func @_softmax_last_kernel(%arg0: i32, %arg1: memref<128x16xf32, #tpu.memory_space<vmem>>, %arg2: memref<128x16xf32, #tpu.memory_space<vmem>>) attributes {dimension_semantics = [#tpu.dimension_semantics<parallel>], iteration_bounds = array<i64: 1>, scalar_prefetch = 0 : i64, scratch_operands = 0 : i64, tpu.core_type = #tpu.core_type<tc>, window_params = [{transform_indices = @transform_0, window_bounds = array<i64: 128, 16>}, {transform_indices = @transform_1, window_bounds = array<i64: 128, 16>}]} {
    %c0 = arith.constant 0 : index
    %c0_0 = arith.constant 0 : index
    %0 = vector.load %arg1[%c0, %c0_0] : memref<128x16xf32, #tpu.memory_space<vmem>>, vector<128x16xf32>
    %cst = arith.constant dense<0xFF800000> : vector<128xf32>
    %1 = vector.multi_reduction <maximumf>, %0, %cst [1] : vector<128x16xf32> to vector<128xf32>
    %2 = vector.shape_cast %1 : vector<128xf32> to vector<128x1xf32>
    %3 = vector.broadcast %2 : vector<128x1xf32> to vector<128x16xf32>
    %4 = arith.subf %0, %3 : vector<128x16xf32>
    %cst_1 = arith.constant 0.176776692 : f32
    %5 = vector.broadcast %cst_1 : f32 to vector<128x16xf32>
    %6 = arith.mulf %4, %5 : vector<128x16xf32>
    %7 = math.exp %6 : vector<128x16xf32>
    %cst_2 = arith.constant dense<0.000000e+00> : vector<128xf32>
    %8 = vector.multi_reduction <add>, %7, %cst_2 [1] : vector<128x16xf32> to vector<128xf32>
    %9 = vector.shape_cast %8 : vector<128xf32> to vector<128x1xf32>
    %10 = tpu.reciprocal %9 : vector<128x1xf32> -> vector<128x1xf32>
    %11 = vector.broadcast %10 : vector<128x1xf32> to vector<128x16xf32>
    %12 = arith.mulf %7, %11 : vector<128x16xf32>
    %c0_3 = arith.constant 0 : index
    %c0_4 = arith.constant 0 : index
    %13 = vector.load %arg2[%c0_3, %c0_4] : memref<128x16xf32, #tpu.memory_space<vmem>>, vector<128x16xf32>
    tpu.vector_store %arg2[%c0_3, %c0_4], %12 {strides = array<i32>} : memref<128x16xf32, #tpu.memory_space<vmem>>, vector<128x16xf32>,
    return
  }
  func.func @transform_0(%arg0: i32) -> (i32, i32) {
    %c0_i32 = arith.constant 0 : i32
    %c0_i32_0 = arith.constant 0 : i32
    return %arg0, %c0_i32 : i32, i32
  }
  func.func @transform_1(%arg0: i32) -> (i32, i32) {
    %c0_i32 = arith.constant 0 : i32
    %c0_i32_0 = arith.constant 0 : i32
    return %arg0, %c0_i32 : i32, i32
  }
}

</mosaic_0001>

<llo_original>
// kernel: tpu_custom_call.1
$region0: #{tpu_custom_call.1}
  #allocation0 [shape = 'u32[]', space=smem, size = 0x4, offset = 0x4, fixed_abs, tag = 'smem constant byte address 0x4 - core index']
  #allocation1 [shape = 'u32[72,128]{1,0:T(1,128)}', space=vmem, size = 0x9000, scoped, tag = 'internal scratch']
  %s0 = inlined_call_operand.vmem [shape: f32[128,16], index: 0, kind: input, shape index: {}]
  %s1 = inlined_call_operand.vmem [shape: f32[128,16], index: 1, kind: output, shape index: {}]
  %s2 = sld [smem:[#allocation0]]
  $region14: #{tpu_custom_call.1} parent=0
    _
  %s4 = ssub.s32 1, %s2
  %s5 = scalar_select 0, %s4, %s2
  // Predicated region
  $region2: #{tpu_custom_call.1} parent=0 // pred_check
    _
  $region3: #{tpu_custom_call.1} parent=0 // pred_check_branch
    %7 = sbr.rel (0) target = $region5
  $region4: #{tpu_custom_call.1} parent=0 // pred_region
    _
  $region5: #{tpu_custom_call.1} parent=0 // pred_fallthru
    _
  %v8 = vld [vmem:[%s0] sm:$0xff]
  %v9 = vld [vmem:[%s0 + $0x8] sm:$0xff]
  %v10 = vld [vmem:[%s0 + $0x10] sm:$0xff]
  %v11 = vld [vmem:[%s0 + $0x18] sm:$0xff]
  %v12 = vld [vmem:[%s0 + $0x20] sm:$0xff]
  %v13 = vld [vmem:[%s0 + $0x28] sm:$0xff]
  %v14 = vld [vmem:[%s0 + $0x30] sm:$0xff]
  %v15 = vld [vmem:[%s0 + $0x38] sm:$0xff]
  %v16 = vld [vmem:[%s0 + $0x40] sm:$0xff]
  %v17 = vld [vmem:[%s0 + $0x48] sm:$0xff]
  %v18 = vld [vmem:[%s0 + $0x50] sm:$0xff]
  %v19 = vld [vmem:[%s0 + $0x58] sm:$0xff]
  %v20 = vld [vmem:[%s0 + $0x60] sm:$0xff]
  %v21 = vld [vmem:[%s0 + $0x68] sm:$0xff]
  %v22 = vld [vmem:[%s0 + $0x70] sm:$0xff]
  %v23 = vld [vmem:[%s0 + $0x78] sm:$0xff]
  %vm24 = vcmask 130048
  %v25 = vsel %vm24, %v8, -inf
  %26 = vmax.xlane.f32.xlu0 %v25
  %v27 = vpop.xlane.xlu0 %26
  %v28 = vsel %vm24, %v9, -inf
  %29 = vmax.xlane.f32.xlu0 %v28
  %v30 = vpop.xlane.xlu0 %29
  %v31 = vsel %vm24, %v10, -inf
  %32 = vmax.xlane.f32.xlu0 %v31
  %v33 = vpop.xlane.xlu0 %32
  %v34 = vsel %vm24, %v11, -inf
  %35 = vmax.xlane.f32.xlu0 %v34
  %v36 = vpop.xlane.xlu0 %35
  %v37 = vsel %vm24, %v12, -inf
  %38 = vmax.xlane.f32.xlu0 %v37
  %v39 = vpop.xlane.xlu0 %38
  %v40 = vsel %vm24, %v13, -inf
  %41 = vmax.xlane.f32.xlu0 %v40
  %v42 = vpop.xlane.xlu0 %41
  %v43 = vsel %vm24, %v14, -inf
  %44 = vmax.xlane.f32.xlu0 %v43
  %v45 = vpop.xlane.xlu0 %44
  %v46 = vsel %vm24, %v15, -inf
  %47 = vmax.xlane.f32.xlu0 %v46
  %v48 = vpop.xlane.xlu0 %47
  %v49 = vsel %vm24, %v16, -inf
  %50 = vmax.xlane.f32.xlu0 %v49
  %v51 = vpop.xlane.xlu0 %50
  %v52 = vsel %vm24, %v17, -inf
  %53 = vmax.xlane.f32.xlu0 %v52
  %v54 = vpop.xlane.xlu0 %53
  %v55 = vsel %vm24, %v18, -inf
  %56 = vmax.xlane.f32.xlu0 %v55
  %v57 = vpop.xlane.xlu0 %56
  %v58 = vsel %vm24, %v19, -inf
  %59 = vmax.xlane.f32.xlu0 %v58
  %v60 = vpop.xlane.xlu0 %59
  %v61 = vsel %vm24, %v20, -inf
  %62 = vmax.xlane.f32.xlu0 %v61
  %v63 = vpop.xlane.xlu0 %62
  %v64 = vsel %vm24, %v21, -inf
  %65 = vmax.xlane.f32.xlu0 %v64
  %v66 = vpop.xlane.xlu0 %65
  %v67 = vsel %vm24, %v22, -inf
  %68 = vmax.xlane.f32.xlu0 %v67
  %v69 = vpop.xlane.xlu0 %68
  %v70 = vsel %vm24, %v23, -inf
  %71 = vmax.xlane.f32.xlu0 %v70
  %v72 = vpop.xlane.xlu0 %71
  %v73 = vsub.f32 %v8, %v27
  %v74 = vsub.f32 %v9, %v30
  %v75 = vsub.f32 %v10, %v33
  %v76 = vsub.f32 %v11, %v36
  %v77 = vsub.f32 %v12, %v39
  %v78 = vsub.f32 %v13, %v42
  %v79 = vsub.f32 %v14, %v45
  %v80 = vsub.f32 %v15, %v48
  %v81 = vsub.f32 %v16, %v51
  %v82 = vsub.f32 %v17, %v54
  %v83 = vsub.f32 %v18, %v57
  %v84 = vsub.f32 %v19, %v60
  %v85 = vsub.f32 %v20, %v63
  %v86 = vsub.f32 %v21, %v66
  %v87 = vsub.f32 %v22, %v69
  %v88 = vsub.f32 %v23, %v72
  %v89 = vmul.f32 %v73, 0.17677669
  %v90 = vmul.f32 %v74, 0.17677669
  %v91 = vmul.f32 %v75, 0.17677669
  %v92 = vmul.f32 %v76, 0.17677669
  %v93 = vmul.f32 %v77, 0.17677669
  %v94 = vmul.f32 %v78, 0.17677669
  %v95 = vmul.f32 %v79, 0.17677669
  %v96 = vmul.f32 %v80, 0.17677669
  %v97 = vmul.f32 %v81, 0.17677669
  %v98 = vmul.f32 %v82, 0.17677669
  %v99 = vmul.f32 %v83, 0.17677669
  %v100 = vmul.f32 %v84, 0.17677669
  %v101 = vmul.f32 %v85, 0.17677669
  %v102 = vmul.f32 %v86, 0.17677669
  %v103 = vmul.f32 %v87, 0.17677669
  %v104 = vmul.f32 %v88, 0.17677669
  %v105 = vmul.f32 %v89, 1.442695
  %v106 = vpow.pop %v105
  %v107 = vmul.f32 %v90, 1.442695
  %v108 = vpow.pop %v107
  %v109 = vmul.f32 %v91, 1.442695
  %v110 = vpow.pop %v109
  %v111 = vmul.f32 %v92, 1.442695
  %v112 = vpow.pop %v111
  %v113 = vmul.f32 %v93, 1.442695
  %v114 = vpow.pop %v113
  %v115 = vmul.f32 %v94, 1.442695
  %v116 = vpow.pop %v115
  %v117 = vmul.f32 %v95, 1.442695
  %v118 = vpow.pop %v117
  %v119 = vmul.f32 %v96, 1.442695
  %v120 = vpow.pop %v119
  %v121 = vmul.f32 %v97, 1.442695
  %v122 = vpow.pop %v121
  %v123 = vmul.f32 %v98, 1.442695
  %v124 = vpow.pop %v123
  %v125 = vmul.f32 %v99, 1.442695
  %v126 = vpow.pop %v125
  %v127 = vmul.f32 %v100, 1.442695
  %v128 = vpow.pop %v127
  %v129 = vmul.f32 %v101, 1.442695
  %v130 = vpow.pop %v129
  %v131 = vmul.f32 %v102, 1.442695
  %v132 = vpow.pop %v131
  %v133 = vmul.f32 %v103, 1.442695
  %v134 = vpow.pop %v133
  %v135 = vmul.f32 %v104, 1.442695
  %v136 = vpow.pop %v135
  %v137 = vsel %vm24, %v106, 0.0
  %138 = vadd.xlane.f32.xlu0 %v137
  %v139 = vpop.xlane.xlu0 %138
  %v140 = vsel %vm24, %v108, 0.0
  %141 = vadd.xlane.f32.xlu0 %v140
  %v142 = vpop.xlane.xlu0 %141
  %v143 = vsel %vm24, %v110, 0.0
  %144 = vadd.xlane.f32.xlu0 %v143
  %v145 = vpop.xlane.xlu0 %144
  %v146 = vsel %vm24, %v112, 0.0
  %147 = vadd.xlane.f32.xlu0 %v146
  %v148 = vpop.xlane.xlu0 %147
  %v149 = vsel %vm24, %v114, 0.0
  %150 = vadd.xlane.f32.xlu0 %v149
  %v151 = vpop.xlane.xlu0 %150
  %v152 = vsel %vm24, %v116, 0.0
  %153 = vadd.xlane.f32.xlu0 %v152
  %v154 = vpop.xlane.xlu0 %153
  %v155 = vsel %vm24, %v118, 0.0
  %156 = vadd.xlane.f32.xlu0 %v155
  %v157 = vpop.xlane.xlu0 %156
  %v158 = vsel %vm24, %v120, 0.0
  %159 = vadd.xlane.f32.xlu0 %v158
  %v160 = vpop.xlane.xlu0 %159
  %v161 = vsel %vm24, %v122, 0.0
  %162 = vadd.xlane.f32.xlu0 %v161
  %v163 = vpop.xlane.xlu0 %162
  %v164 = vsel %vm24, %v124, 0.0
  %165 = vadd.xlane.f32.xlu0 %v164
  %v166 = vpop.xlane.xlu0 %165
  %v167 = vsel %vm24, %v126, 0.0
  %168 = vadd.xlane.f32.xlu0 %v167
  %v169 = vpop.xlane.xlu0 %168
  %v170 = vsel %vm24, %v128, 0.0
  %171 = vadd.xlane.f32.xlu0 %v170
  %v172 = vpop.xlane.xlu0 %171
  %v173 = vsel %vm24, %v130, 0.0
  %174 = vadd.xlane.f32.xlu0 %v173
  %v175 = vpop.xlane.xlu0 %174
  %v176 = vsel %vm24, %v132, 0.0
  %177 = vadd.xlane.f32.xlu0 %v176
  %v178 = vpop.xlane.xlu0 %177
  %v179 = vsel %vm24, %v134, 0.0
  %180 = vadd.xlane.f32.xlu0 %v179
  %v181 = vpop.xlane.xlu0 %180
  %v182 = vsel %vm24, %v136, 0.0
  %183 = vadd.xlane.f32.xlu0 %v182
  %v184 = vpop.xlane.xlu0 %183
  %v185 = vrcp.pop %v139
  %v186 = vmul.f32 %v139, %v185
  %v187 = vsub.f32 1.0, %v186
  %v188 = vmul.f32 %v185, %v187
  %v189 = vadd.f32 %v185, %v188
  %vm190 = vweird.f32 %v139
  %vm191 = vweird.f32 %v185
  %vm192 = vmor %vm190, %vm191
  %v193 = vsel %vm192, %v185, %v189
  %v194 = vand.u32 2147483647, %v139
  %vm195 = vcmp.eq.f32.partialorder %v194, 8.507059e+37
  %v196 = vand.u32 %v139, 2147483648
  %v197 = vor.u32 1.1754944e-38, %v196
  %v198 = vsel %vm195, %v197, %v193
  %v199 = vrcp.pop %v142
  %v200 = vmul.f32 %v142, %v199
  %v201 = vsub.f32 1.0, %v200
  %v202 = vmul.f32 %v199, %v201
  %v203 = vadd.f32 %v199, %v202
  %vm204 = vweird.f32 %v142
  %vm205 = vweird.f32 %v199
  %vm206 = vmor %vm204, %vm205
  %v207 = vsel %vm206, %v199, %v203
  %v208 = vand.u32 2147483647, %v142
  %vm209 = vcmp.eq.f32.partialorder %v208, 8.507059e+37
  %v210 = vand.u32 %v142, 2147483648
  %v211 = vor.u32 1.1754944e-38, %v210
  %v212 = vsel %vm209, %v211, %v207
  %v213 = vrcp.pop %v145
  %v214 = vmul.f32 %v145, %v213
  %v215 = vsub.f32 1.0, %v214
  %v216 = vmul.f32 %v213, %v215
  %v217 = vadd.f32 %v213, %v216
  %vm218 = vweird.f32 %v145
  %vm219 = vweird.f32 %v213
  %vm220 = vmor %vm218, %vm219
  %v221 = vsel %vm220, %v213, %v217
  %v222 = vand.u32 2147483647, %v145
  %vm223 = vcmp.eq.f32.partialorder %v222, 8.507059e+37
  %v224 = vand.u32 %v145, 2147483648
  %v225 = vor.u32 1.1754944e-38, %v224
  %v226 = vsel %vm223, %v225, %v221
  %v227 = vrcp.pop %v148
  %v228 = vmul.f32 %v148, %v227
  %v229 = vsub.f32 1.0, %v228
  %v230 = vmul.f32 %v227, %v229
  %v231 = vadd.f32 %v227, %v230
  %vm232 = vweird.f32 %v148
  %vm233 = vweird.f32 %v227
  %vm234 = vmor %vm232, %vm233
  %v235 = vsel %vm234, %v227, %v231
  %v236 = vand.u32 2147483647, %v148
  %vm237 = vcmp.eq.f32.partialorder %v236, 8.507059e+37
  %v238 = vand.u32 %v148, 2147483648
  %v239 = vor.u32 1.1754944e-38, %v238
  %v240 = vsel %vm237, %v239, %v235
  %v241 = vrcp.pop %v151
  %v242 = vmul.f32 %v151, %v241
  %v243 = vsub.f32 1.0, %v242
  %v244 = vmul.f32 %v241, %v243
  %v245 = vadd.f32 %v241, %v244
  %vm246 = vweird.f32 %v151
  %vm247 = vweird.f32 %v241
  %vm248 = vmor %vm246, %vm247
  %v249 = vsel %vm248, %v241, %v245
  %v250 = vand.u32 2147483647, %v151
  %vm251 = vcmp.eq.f32.partialorder %v250, 8.507059e+37
  %v252 = vand.u32 %v151, 2147483648
  %v253 = vor.u32 1.1754944e-38, %v252
  %v254 = vsel %vm251, %v253, %v249
  %v255 = vrcp.pop %v154
  %v256 = vmul.f32 %v154, %v255
  %v257 = vsub.f32 1.0, %v256
  %v258 = vmul.f32 %v255, %v257
  %v259 = vadd.f32 %v255, %v258
  %vm260 = vweird.f32 %v154
  %vm261 = vweird.f32 %v255
  %vm262 = vmor %vm260, %vm261
  %v263 = vsel %vm262, %v255, %v259
  %v264 = vand.u32 2147483647, %v154
  %vm265 = vcmp.eq.f32.partialorder %v264, 8.507059e+37
  %v266 = vand.u32 %v154, 2147483648
  %v267 = vor.u32 1.1754944e-38, %v266
  %v268 = vsel %vm265, %v267, %v263
  %v269 = vrcp.pop %v157
  %v270 = vmul.f32 %v157, %v269
  %v271 = vsub.f32 1.0, %v270
  %v272 = vmul.f32 %v269, %v271
  %v273 = vadd.f32 %v269, %v272
  %vm274 = vweird.f32 %v157
  %vm275 = vweird.f32 %v269
  %vm276 = vmor %vm274, %vm275
  %v277 = vsel %vm276, %v269, %v273
  %v278 = vand.u32 2147483647, %v157
  %vm279 = vcmp.eq.f32.partialorder %v278, 8.507059e+37
  %v280 = vand.u32 %v157, 2147483648
  %v281 = vor.u32 1.1754944e-38, %v280
  %v282 = vsel %vm279, %v281, %v277
  %v283 = vrcp.pop %v160
  %v284 = vmul.f32 %v160, %v283
  %v285 = vsub.f32 1.0, %v284
  %v286 = vmul.f32 %v283, %v285
  %v287 = vadd.f32 %v283, %v286
  %vm288 = vweird.f32 %v160
  %vm289 = vweird.f32 %v283
  %vm290 = vmor %vm288, %vm289
  %v291 = vsel %vm290, %v283, %v287
  %v292 = vand.u32 2147483647, %v160
  %vm293 = vcmp.eq.f32.partialorder %v292, 8.507059e+37
  %v294 = vand.u32 %v160, 2147483648
  %v295 = vor.u32 1.1754944e-38, %v294
  %v296 = vsel %vm293, %v295, %v291
  %v297 = vrcp.pop %v163
  %v298 = vmul.f32 %v163, %v297
  %v299 = vsub.f32 1.0, %v298
  %v300 = vmul.f32 %v297, %v299
  %v301 = vadd.f32 %v297, %v300
  %vm302 = vweird.f32 %v163
  %vm303 = vweird.f32 %v297
  %vm304 = vmor %vm302, %vm303
  %v305 = vsel %vm304, %v297, %v301
  %v306 = vand.u32 2147483647, %v163
  %vm307 = vcmp.eq.f32.partialorder %v306, 8.507059e+37
  %v308 = vand.u32 %v163, 2147483648
  %v309 = vor.u32 1.1754944e-38, %v308
  %v310 = vsel %vm307, %v309, %v305
  %v311 = vrcp.pop %v166
  %v312 = vmul.f32 %v166, %v311
  %v313 = vsub.f32 1.0, %v312
  %v314 = vmul.f32 %v311, %v313
  %v315 = vadd.f32 %v311, %v314
  %vm316 = vweird.f32 %v166
  %vm317 = vweird.f32 %v311
  %vm318 = vmor %vm316, %vm317
  %v319 = vsel %vm318, %v311, %v315
  %v320 = vand.u32 2147483647, %v166
  %vm321 = vcmp.eq.f32.partialorder %v320, 8.507059e+37
  %v322 = vand.u32 %v166, 2147483648
  %v323 = vor.u32 1.1754944e-38, %v322
  %v324 = vsel %vm321, %v323, %v319
  %v325 = vrcp.pop %v169
  %v326 = vmul.f32 %v169, %v325
  %v327 = vsub.f32 1.0, %v326
  %v328 = vmul.f32 %v325, %v327
  %v329 = vadd.f32 %v325, %v328
  %vm330 = vweird.f32 %v169
  %vm331 = vweird.f32 %v325
  %vm332 = vmor %vm330, %vm331
  %v333 = vsel %vm332, %v325, %v329
  %v334 = vand.u32 2147483647, %v169
  %vm335 = vcmp.eq.f32.partialorder %v334, 8.507059e+37
  %v336 = vand.u32 %v169, 2147483648
  %v337 = vor.u32 1.1754944e-38, %v336
  %v338 = vsel %vm335, %v337, %v333
  %v339 = vrcp.pop %v172
  %v340 = vmul.f32 %v172, %v339
  %v341 = vsub.f32 1.0, %v340
  %v342 = vmul.f32 %v339, %v341
  %v343 = vadd.f32 %v339, %v342
  %vm344 = vweird.f32 %v172
  %vm345 = vweird.f32 %v339
  %vm346 = vmor %vm344, %vm345
  %v347 = vsel %vm346, %v339, %v343
  %v348 = vand.u32 2147483647, %v172
  %vm349 = vcmp.eq.f32.partialorder %v348, 8.507059e+37
  %v350 = vand.u32 %v172, 2147483648
  %v351 = vor.u32 1.1754944e-38, %v350
  %v352 = vsel %vm349, %v351, %v347
  %v353 = vrcp.pop %v175
  %v354 = vmul.f32 %v175, %v353
  %v355 = vsub.f32 1.0, %v354
  %v356 = vmul.f32 %v353, %v355
  %v357 = vadd.f32 %v353, %v356
  %vm358 = vweird.f32 %v175
  %vm359 = vweird.f32 %v353
  %vm360 = vmor %vm358, %vm359
  %v361 = vsel %vm360, %v353, %v357
  %v362 = vand.u32 2147483647, %v175
  %vm363 = vcmp.eq.f32.partialorder %v362, 8.507059e+37
  %v364 = vand.u32 %v175, 2147483648
  %v365 = vor.u32 1.1754944e-38, %v364
  %v366 = vsel %vm363, %v365, %v361
  %v367 = vrcp.pop %v178
  %v368 = vmul.f32 %v178, %v367
  %v369 = vsub.f32 1.0, %v368
  %v370 = vmul.f32 %v367, %v369
  %v371 = vadd.f32 %v367, %v370
  %vm372 = vweird.f32 %v178
  %vm373 = vweird.f32 %v367
  %vm374 = vmor %vm372, %vm373
  %v375 = vsel %vm374, %v367, %v371
  %v376 = vand.u32 2147483647, %v178
  %vm377 = vcmp.eq.f32.partialorder %v376, 8.507059e+37
  %v378 = vand.u32 %v178, 2147483648
  %v379 = vor.u32 1.1754944e-38, %v378
  %v380 = vsel %vm377, %v379, %v375
  %v381 = vrcp.pop %v181
  %v382 = vmul.f32 %v181, %v381
  %v383 = vsub.f32 1.0, %v382
  %v384 = vmul.f32 %v381, %v383
  %v385 = vadd.f32 %v381, %v384
  %vm386 = vweird.f32 %v181
  %vm387 = vweird.f32 %v381
  %vm388 = vmor %vm386, %vm387
  %v389 = vsel %vm388, %v381, %v385
  %v390 = vand.u32 2147483647, %v181
  %vm391 = vcmp.eq.f32.partialorder %v390, 8.507059e+37
  %v392 = vand.u32 %v181, 2147483648
  %v393 = vor.u32 1.1754944e-38, %v392
  %v394 = vsel %vm391, %v393, %v389
  %v395 = vrcp.pop %v184
  %v396 = vmul.f32 %v184, %v395
  %v397 = vsub.f32 1.0, %v396
  %v398 = vmul.f32 %v395, %v397
  %v399 = vadd.f32 %v395, %v398
  %vm400 = vweird.f32 %v184
  %vm401 = vweird.f32 %v395
  %vm402 = vmor %vm400, %vm401
  %v403 = vsel %vm402, %v395, %v399
  %v404 = vand.u32 2147483647, %v184
  %vm405 = vcmp.eq.f32.partialorder %v404, 8.507059e+37
  %v406 = vand.u32 %v184, 2147483648
  %v407 = vor.u32 1.1754944e-38, %v406
  %v408 = vsel %vm405, %v407, %v403
  %v409 = vmul.f32 %v106, %v198
  %v410 = vmul.f32 %v108, %v212
  %v411 = vmul.f32 %v110, %v226
  %v412 = vmul.f32 %v112, %v240
  %v413 = vmul.f32 %v114, %v254
  %v414 = vmul.f32 %v116, %v268
  %v415 = vmul.f32 %v118, %v282
  %v416 = vmul.f32 %v120, %v296
  %v417 = vmul.f32 %v122, %v310
  %v418 = vmul.f32 %v124, %v324
  %v419 = vmul.f32 %v126, %v338
  %v420 = vmul.f32 %v128, %v352
  %v421 = vmul.f32 %v130, %v366
  %v422 = vmul.f32 %v132, %v380
  %v423 = vmul.f32 %v134, %v394
  %v424 = vmul.f32 %v136, %v408
  %425 = vst.msk [vmem:[%s1] sm:$0xff] %vm24, %v409
  %426 = vst.msk [vmem:[%s1 + $0x8] sm:$0xff] %vm24, %v410
  %427 = vst.msk [vmem:[%s1 + $0x10] sm:$0xff] %vm24, %v411
  %428 = vst.msk [vmem:[%s1 + $0x18] sm:$0xff] %vm24, %v412
  %429 = vst.msk [vmem:[%s1 + $0x20] sm:$0xff] %vm24, %v413
  %430 = vst.msk [vmem:[%s1 + $0x28] sm:$0xff] %vm24, %v414
  %431 = vst.msk [vmem:[%s1 + $0x30] sm:$0xff] %vm24, %v415
  %432 = vst.msk [vmem:[%s1 + $0x38] sm:$0xff] %vm24, %v416
  %433 = vst.msk [vmem:[%s1 + $0x40] sm:$0xff] %vm24, %v417
  %434 = vst.msk [vmem:[%s1 + $0x48] sm:$0xff] %vm24, %v418
  %435 = vst.msk [vmem:[%s1 + $0x50] sm:$0xff] %vm24, %v419
  %436 = vst.msk [vmem:[%s1 + $0x58] sm:$0xff] %vm24, %v420
  %437 = vst.msk [vmem:[%s1 + $0x60] sm:$0xff] %vm24, %v421
  %438 = vst.msk [vmem:[%s1 + $0x68] sm:$0xff] %vm24, %v422
  %439 = vst.msk [vmem:[%s1 + $0x70] sm:$0xff] %vm24, %v423
  %440 = vst.msk [vmem:[%s1 + $0x78] sm:$0xff] %vm24, %v424
  // Predicated region
  $region6: #{tpu_custom_call.1} parent=0 // pred_check
    _
  $region7: #{tpu_custom_call.1} parent=0 // pred_check_branch
    %442 = sbr.rel (0) target = $region9
  $region8: #{tpu_custom_call.1} parent=0 // pred_region
    _
  $region9: #{tpu_custom_call.1} parent=0 // pred_fallthru
    _
  // Predicated region
  $region10: #{tpu_custom_call.1} parent=0 // pred_check
    _
  $region11: #{tpu_custom_call.1} parent=0 // pred_check_branch
    %444 = sbr.rel (0) target = $region13
  $region12: #{tpu_custom_call.1} parent=0 // pred_region
    _
  $region13: #{tpu_custom_call.1} parent=0 // pred_fallthru
    _

</llo_original>
